<compile_context>
chip_gen: v6e
topology: v6e:2x2x1
jax: 0.10.0
libtpu: 0.0.40
codegen_flags: <defaults>
</compile_context>

<pallas_src>
import jax
import jax.numpy as jnp
from jax.experimental import pallas as pl
from jax.experimental.pallas import tpu as pltpu


def _round_up(n, m):
    return (n + m - 1) // m * m


def _vae_kernel(x_ref, eps_ref,
                we_ref, be_ref, wh_ref, bh_ref, wd_ref, bd_ref,
                xhat_ref, heads_ref):
    # Matmul-input dtype follows the (possibly bf16) weights; accumulation and
    # all elementwise math stay in f32.
    mm_dtype = we_ref.dtype

    # Read/broadcast biases once per tile (f32).
    be = be_ref[...].astype(jnp.float32)
    bh = bh_ref[...].astype(jnp.float32)
    bd = bd_ref[...].astype(jnp.float32)

    # Encoder: h = relu(x @ We + be)
    h = jnp.dot(x_ref[...].astype(mm_dtype), we_ref[...],
                preferred_element_type=jnp.float32)
    h = jnp.maximum(h + be, 0.0)

    # Fused mean/logvar heads: one (Z, 2Z) matmul, lane-dense (TM, 2Z) result.
    heads = jnp.dot(h.astype(mm_dtype), wh_ref[...],
                    preferred_element_type=jnp.float32) + bh
    z_dim = heads.shape[-1] // 2
    mean = heads[:, :z_dim]
    logvar = heads[:, z_dim:]

    # Reparameterization: z = mean + exp(0.5 * logvar) * eps
    std = jnp.exp(0.5 * logvar)
    z = mean + std * eps_ref[...].astype(jnp.float32)

    # Decoder: x_hat = relu(z @ Wd + bd)
    xh = jnp.dot(z.astype(mm_dtype), wd_ref[...],
                 preferred_element_type=jnp.float32)
    xh = jnp.maximum(xh + bd, 0.0)

    xhat_ref[...] = xh.astype(xhat_ref.dtype)
    heads_ref[...] = heads.astype(heads_ref.dtype)


def simple_vae_forward(x, params, eps, *, tile_m=256,
                       matmul_dtype=jnp.float32):
    """x: (B, T, F) f32.  eps: (B, T, Z) f32 (the randn_like draw).

    Returns (x_hat, mean, logvar) with shapes (B,T,F), (B,T,Z), (B,T,Z).
    `matmul_dtype=jnp.bfloat16` feeds the MXU bf16 inputs (v6e/v7x win) while
    keeping f32 accumulation and f32 elementwise math.
    """
    B, T, F = x.shape
    Z = params["w_mean"].shape[1]
    M = B * T

    # Flatten (B, T) -> M rows; pad M up to a multiple of the row tile.
    x2d = x.reshape(M, F)
    eps2d = eps.reshape(M, Z)

    tm = min(tile_m, _round_up(M, 8))
    m_pad = _round_up(M, tm)
    if m_pad != M:
        x2d = jnp.pad(x2d, ((0, m_pad - M), (0, 0)))
        eps2d = jnp.pad(eps2d, ((0, m_pad - M), (0, 0)))

    # Fuse the mean/logvar heads into one (Z, 2Z) weight / (1, 2Z) bias.
    w_heads = jnp.concatenate([params["w_mean"], params["w_logvar"]], axis=1)
    b_heads = jnp.concatenate([params["b_mean"], params["b_logvar"]], axis=1)

    w_enc = params["w_enc"].astype(matmul_dtype)
    w_heads = w_heads.astype(matmul_dtype)
    w_dec = params["w_dec"].astype(matmul_dtype)

    grid = (m_pad // tm,)

    row_spec_x = pl.BlockSpec((tm, F), lambda i: (i, 0))
    row_spec_eps = pl.BlockSpec((tm, Z), lambda i: (i, 0))
    row_spec_xhat = pl.BlockSpec((tm, F), lambda i: (i, 0))
    row_spec_heads = pl.BlockSpec((tm, 2 * Z), lambda i: (i, 0))

    def resident(shape):
        # Full-array block that stays VMEM-resident across all grid steps.
        return pl.BlockSpec(shape, lambda i: tuple(0 for _ in shape))

    in_specs = [
        row_spec_x,
        row_spec_eps,
        resident(w_enc.shape),
        resident(params["b_enc"].shape),
        resident(w_heads.shape),
        resident(b_heads.shape),
        resident(w_dec.shape),
        resident(params["b_dec"].shape),
    ]

    out_shapes = (
        jax.ShapeDtypeStruct((m_pad, F), jnp.float32),      # x_hat
        jax.ShapeDtypeStruct((m_pad, 2 * Z), jnp.float32),  # [mean | logvar]
    )
    out_specs = (row_spec_xhat, row_spec_heads)

    # VMEM budget: double-buffered row tiles + resident weights + headroom.
    itemsize = jnp.dtype(matmul_dtype).itemsize
    tile_bytes = tm * (F + Z + F + 2 * Z) * 4
    weight_bytes = itemsize * (F * Z + Z * 2 * Z + Z * F) + 4 * (Z + 2 * Z + F)
    vmem_limit = int(min(2 * 2 * tile_bytes + 4 * weight_bytes + (4 << 20),
                         64 << 20))

    flops = 2 * m_pad * (F * Z + Z * 2 * Z + Z * F)
    bytes_accessed = 4 * m_pad * (F + Z + F + 2 * Z) + weight_bytes
    cost = pl.CostEstimate(flops=flops, transcendentals=m_pad * Z,
                           bytes_accessed=bytes_accessed)

    x_hat2d, heads2d = pl.pallas_call(
        _vae_kernel,
        out_shape=out_shapes,
        grid=grid,
        in_specs=in_specs,
        out_specs=out_specs,
        compiler_params=pltpu.CompilerParams(
            dimension_semantics=("parallel",),
            vmem_limit_bytes=vmem_limit),
        cost_estimate=cost,
    )(x2d, eps2d,
      w_enc, params["b_enc"],
      w_heads, b_heads,
      w_dec, params["b_dec"])

    x_hat = x_hat2d[:M].reshape(B, T, F)
    mean = heads2d[:M, :Z].reshape(B, T, Z)
    logvar = heads2d[:M, Z:].reshape(B, T, Z)
    return x_hat, mean, logvar


def init_params(key, feature_dim, z_dim):
    """Deterministic synthetic parameters (torch-Linear shapes, transposed)."""
    ks = jax.random.split(key, 8)

    def lin(kw, kb, fan_in, fan_out):
        bound = 1.0 / jnp.sqrt(fan_in)
        w = jax.random.uniform(kw, (fan_in, fan_out), jnp.float32, -bound, bound)
        b = jax.random.uniform(kb, (1, fan_out), jnp.float32, -bound, bound)
        return w, b

    w_enc, b_enc = lin(ks[0], ks[1], feature_dim, z_dim)
    w_mean, b_mean = lin(ks[2], ks[3], z_dim, z_dim)
    w_logvar, b_logvar = lin(ks[4], ks[5], z_dim, z_dim)
    w_dec, b_dec = lin(ks[6], ks[7], z_dim, feature_dim)

    return dict(w_enc=w_enc, b_enc=b_enc,
                w_mean=w_mean, b_mean=b_mean,
                w_logvar=w_logvar, b_logvar=b_logvar,
                w_dec=w_dec, b_dec=b_dec)


def reference_forward(x, params, eps):
    """Pure-JAX reference of the torch module's forward."""
    h = jax.nn.relu(x @ params["w_enc"] + params["b_enc"][0])
    mean = h @ params["w_mean"] + params["b_mean"][0]
    logvar = h @ params["w_logvar"] + params["b_logvar"][0]
    std = jnp.exp(0.5 * logvar)
    z = mean + std * eps
    x_hat = jax.nn.relu(z @ params["w_dec"] + params["b_dec"][0])
    return x_hat, mean, logvar


if __name__ == "__main__":
    # SIMPLEVAE(input_dims=(time_dim, feature_dim), z_dim)
    batch, time_dim, feature_dim, z_dim = 2, 8, 16, 32

    key = jax.random.PRNGKey(0)
    k_param, k_x, k_eps = jax.random.split(key, 3)

    params = init_params(k_param, feature_dim, z_dim)
    x = jax.random.normal(k_x, (batch, time_dim, feature_dim), jnp.float32)
    # epsilon corresponds to torch.randn_like(std) in reparameterization
    eps = jax.random.normal(k_eps, (batch, time_dim, z_dim), jnp.float32)

    # f32 matmul path (default) — bit-for-bit comparable to the reference.
    x_hat, mean, logvar = simple_vae_forward(x, params, eps)
    jax.block_until_ready((x_hat, mean, logvar))

    x_hat_r, mean_r, logvar_r = reference_forward(x, params, eps)
    assert jnp.allclose(x_hat, x_hat_r, atol=1e-5, rtol=1e-5)
    assert jnp.allclose(mean, mean_r, atol=1e-5, rtol=1e-5)
    assert jnp.allclose(logvar, logvar_r, atol=1e-5, rtol=1e-5)

    # bf16 MXU-input path (v6e/v7x recommendation): f32 accumulation, looser tol.
    x_hat_b, mean_b, logvar_b = simple_vae_forward(
        x, params, eps, matmul_dtype=jnp.bfloat16)
    jax.block_until_ready((x_hat_b, mean_b, logvar_b))
    assert jnp.allclose(x_hat_b, x_hat_r, atol=1e-1, rtol=1e-1)
    assert jnp.allclose(mean_b, mean_r, atol=1e-1, rtol=1e-1)
    assert jnp.allclose(logvar_b, logvar_r, atol=1e-1, rtol=1e-1)

    # TODO(synk): at these toy shapes (M=16, F=16, Z=32) wall time is launch/DMA
    # overhead; benchmark at production M (thousands of rows) and F/Z >= 128.

    print("KERNEL_OK")
</pallas_src>

<mosaic_0001>
module attributes {stable_mosaic.version = 11 : i64} {
  func.func @_vae_kernel(%arg0: i32, %arg1: memref<16x16xf32, #tpu.memory_space<vmem>>, %arg2: memref<16x32xf32, #tpu.memory_space<vmem>>, %arg3: memref<16x32xf32, #tpu.memory_space<vmem>>, %arg4: memref<1x32xf32, #tpu.memory_space<vmem>>, %arg5: memref<32x64xf32, #tpu.memory_space<vmem>>, %arg6: memref<1x64xf32, #tpu.memory_space<vmem>>, %arg7: memref<32x16xf32, #tpu.memory_space<vmem>>, %arg8: memref<1x16xf32, #tpu.memory_space<vmem>>, %arg9: memref<16x16xf32, #tpu.memory_space<vmem>>, %arg10: memref<16x64xf32, #tpu.memory_space<vmem>>) attributes {dimension_semantics = [#tpu.dimension_semantics<parallel>], iteration_bounds = array<i64: 1>, scalar_prefetch = 0 : i64, scratch_operands = 0 : i64, tpu.core_type = #tpu.core_type<tc>, window_params = [{transform_indices = @transform_0, window_bounds = array<i64: 16, 16>}, {transform_indices = @transform_1, window_bounds = array<i64: 16, 32>}, {pipeline_mode = #tpu.pipeline_mode<synchronous>, transform_indices = @transform_2, window_bounds = array<i64: 16, 32>}, {pipeline_mode = #tpu.pipeline_mode<synchronous>, transform_indices = @transform_3, window_bounds = array<i64: 1, 32>}, {pipeline_mode = #tpu.pipeline_mode<synchronous>, transform_indices = @transform_4, window_bounds = array<i64: 32, 64>}, {pipeline_mode = #tpu.pipeline_mode<synchronous>, transform_indices = @transform_5, window_bounds = array<i64: 1, 64>}, {pipeline_mode = #tpu.pipeline_mode<synchronous>, transform_indices = @transform_6, window_bounds = array<i64: 32, 16>}, {pipeline_mode = #tpu.pipeline_mode<synchronous>, transform_indices = @transform_7, window_bounds = array<i64: 1, 16>}, {transform_indices = @transform_8, window_bounds = array<i64: 16, 16>}, {transform_indices = @transform_9, window_bounds = array<i64: 16, 64>}]} {
    %c0 = arith.constant 0 : index
    %c0_0 = arith.constant 0 : index
    %0 = vector.load %arg4[%c0, %c0_0] : memref<1x32xf32, #tpu.memory_space<vmem>>, vector<1x32xf32>
    %c0_1 = arith.constant 0 : index
    %c0_2 = arith.constant 0 : index
    %1 = vector.load %arg6[%c0_1, %c0_2] : memref<1x64xf32, #tpu.memory_space<vmem>>, vector<1x64xf32>
    %c0_3 = arith.constant 0 : index
    %c0_4 = arith.constant 0 : index
    %2 = vector.load %arg8[%c0_3, %c0_4] : memref<1x16xf32, #tpu.memory_space<vmem>>, vector<1x16xf32>
    %c0_5 = arith.constant 0 : index
    %c0_6 = arith.constant 0 : index
    %3 = vector.load %arg1[%c0_5, %c0_6] : memref<16x16xf32, #tpu.memory_space<vmem>>, vector<16x16xf32>
    %c0_7 = arith.constant 0 : index
    %c0_8 = arith.constant 0 : index
    %4 = vector.load %arg3[%c0_7, %c0_8] : memref<16x32xf32, #tpu.memory_space<vmem>>, vector<16x32xf32>
    %cst = arith.constant dense<0.000000e+00> : vector<16x32xf32>
    %5 = tpu.matmul %3, %4, %cst {dimension_numbers = #tpu.dot_dimension_numbers<[1], [0], [0], [1], [0, 0, 1, 1], [], []>} : vector<16x16xf32>, vector<16x32xf32>, vector<16x32xf32> -> vector<16x32xf32>
    %6 = vector.broadcast %0 : vector<1x32xf32> to vector<16x32xf32>
    %7 = arith.addf %5, %6 : vector<16x32xf32>
    %cst_9 = arith.constant 0.000000e+00 : f32
    %8 = vector.broadcast %cst_9 : f32 to vector<16x32xf32>
    %9 = arith.maximumf %7, %8 : vector<16x32xf32>
    %c0_10 = arith.constant 0 : index
    %c0_11 = arith.constant 0 : index
    %10 = vector.load %arg5[%c0_10, %c0_11] : memref<32x64xf32, #tpu.memory_space<vmem>>, vector<32x64xf32>
    %cst_12 = arith.constant dense<0.000000e+00> : vector<16x64xf32>
    %11 = tpu.matmul %9, %10, %cst_12 {dimension_numbers = #tpu.dot_dimension_numbers<[1], [0], [0], [1], [0, 0, 1, 1], [], []>} : vector<16x32xf32>, vector<32x64xf32>, vector<16x64xf32> -> vector<16x64xf32>
    %12 = vector.broadcast %1 : vector<1x64xf32> to vector<16x64xf32>
    %13 = arith.addf %11, %12 : vector<16x64xf32>
    %14 = vector.extract_strided_slice %13 {offsets = [0, 0], sizes = [16, 32], strides = [1, 1]} : vector<16x64xf32> to vector<16x32xf32>
    %15 = vector.extract_strided_slice %13 {offsets = [0, 32], sizes = [16, 32], strides = [1, 1]} : vector<16x64xf32> to vector<16x32xf32>
    %cst_13 = arith.constant 5.000000e-01 : f32
    %16 = vector.broadcast %cst_13 : f32 to vector<16x32xf32>
    %17 = arith.mulf %16, %15 : vector<16x32xf32>
    %18 = math.exp %17 : vector<16x32xf32>
    %c0_14 = arith.constant 0 : index
    %c0_15 = arith.constant 0 : index
    %19 = vector.load %arg2[%c0_14, %c0_15] : memref<16x32xf32, #tpu.memory_space<vmem>>, vector<16x32xf32>
    %20 = arith.mulf %18, %19 : vector<16x32xf32>
    %21 = arith.addf %14, %20 : vector<16x32xf32>
    %c0_16 = arith.constant 0 : index
    %c0_17 = arith.constant 0 : index
    %22 = vector.load %arg7[%c0_16, %c0_17] : memref<32x16xf32, #tpu.memory_space<vmem>>, vector<32x16xf32>
    %cst_18 = arith.constant dense<0.000000e+00> : vector<16x16xf32>
    %23 = tpu.matmul %21, %22, %cst_18 {dimension_numbers = #tpu.dot_dimension_numbers<[1], [0], [0], [1], [0, 0, 1, 1], [], []>} : vector<16x32xf32>, vector<32x16xf32>, vector<16x16xf32> -> vector<16x16xf32>
    %24 = vector.broadcast %2 : vector<1x16xf32> to vector<16x16xf32>
    %25 = arith.addf %23, %24 : vector<16x16xf32>
    %cst_19 = arith.constant 0.000000e+00 : f32
    %26 = vector.broadcast %cst_19 : f32 to vector<16x16xf32>
    %27 = arith.maximumf %25, %26 : vector<16x16xf32>
    %c0_20 = arith.constant 0 : index
    %c0_21 = arith.constant 0 : index
    %28 = vector.load %arg9[%c0_20, %c0_21] : memref<16x16xf32, #tpu.memory_space<vmem>>, vector<16x16xf32>
    tpu.vector_store %arg9[%c0_20, %c0_21], %27 {strides = array<i32>} : memref<16x16xf32, #tpu.memory_space<vmem>>, vector<16x16xf32>,
    %c0_22 = arith.constant 0 : index
    %c0_23 = arith.constant 0 : index
    %29 = vector.load %arg10[%c0_22, %c0_23] : memref<16x64xf32, #tpu.memory_space<vmem>>, vector<16x64xf32>
    tpu.vector_store %arg10[%c0_22, %c0_23], %13 {strides = array<i32>} : memref<16x64xf32, #tpu.memory_space<vmem>>, vector<16x64xf32>,
    return
  }
  func.func @transform_0(%arg0: i32) -> (i32, i32) {
    %c0_i32 = arith.constant 0 : i32
    %c0_i32_0 = arith.constant 0 : i32
    return %arg0, %c0_i32 : i32, i32
  }
  func.func @transform_1(%arg0: i32) -> (i32, i32) {
    %c0_i32 = arith.constant 0 : i32
    %c0_i32_0 = arith.constant 0 : i32
    return %arg0, %c0_i32 : i32, i32
  }
  func.func @transform_2(%arg0: i32) -> (i32, i32) {
    %c0_i32 = arith.constant 0 : i32
    %c0_i32_0 = arith.constant 0 : i32
    %c0_i32_1 = arith.constant 0 : i32
    return %c0_i32, %c0_i32_0 : i32, i32
  }
  func.func @transform_3(%arg0: i32) -> (i32, i32) {
    %c0_i32 = arith.constant 0 : i32
    %c0_i32_0 = arith.constant 0 : i32
    %c0_i32_1 = arith.constant 0 : i32
    return %c0_i32, %c0_i32_0 : i32, i32
  }
  func.func @transform_4(%arg0: i32) -> (i32, i32) {
    %c0_i32 = arith.constant 0 : i32
    %c0_i32_0 = arith.constant 0 : i32
    %c0_i32_1 = arith.constant 0 : i32
    return %c0_i32, %c0_i32_0 : i32, i32
  }
  func.func @transform_5(%arg0: i32) -> (i32, i32) {
    %c0_i32 = arith.constant 0 : i32
    %c0_i32_0 = arith.constant 0 : i32
    %c0_i32_1 = arith.constant 0 : i32
    return %c0_i32, %c0_i32_0 : i32, i32
  }
  func.func @transform_6(%arg0: i32) -> (i32, i32) {
    %c0_i32 = arith.constant 0 : i32
    %c0_i32_0 = arith.constant 0 : i32
    %c0_i32_1 = arith.constant 0 : i32
    return %c0_i32, %c0_i32_0 : i32, i32
  }
  func.func @transform_7(%arg0: i32) -> (i32, i32) {
    %c0_i32 = arith.constant 0 : i32
    %c0_i32_0 = arith.constant 0 : i32
    %c0_i32_1 = arith.constant 0 : i32
    return %c0_i32, %c0_i32_0 : i32, i32
  }
  func.func @transform_8(%arg0: i32) -> (i32, i32) {
    %c0_i32 = arith.constant 0 : i32
    %c0_i32_0 = arith.constant 0 : i32
    return %arg0, %c0_i32 : i32, i32
  }
  func.func @transform_9(%arg0: i32) -> (i32, i32) {
    %c0_i32 = arith.constant 0 : i32
    %c0_i32_0 = arith.constant 0 : i32
    return %arg0, %c0_i32 : i32, i32
  }
}

</mosaic_0001>

<llo_original>
// kernel: tpu_custom_call.1
$region0: #{tpu_custom_call.1}
  #allocation0 [shape = 'u32[]', space=smem, size = 0x4, offset = 0x4, fixed_abs, tag = 'smem constant byte address 0x4 - core index']
  #allocation1 [shape = 'u32[144,128]{1,0:T(1,128)}', space=vmem, size = 0x12000, scoped, tag = 'internal scratch']
  %s0 = inlined_call_operand.vmem [shape: f32[16,16], index: 0, kind: input, shape index: {}]
  %s1 = inlined_call_operand.hbm [shape: f32[16,32], index: 1, kind: input, shape index: {}]
  %s2 = inlined_call_operand.hbm [shape: f32[16,32], index: 2, kind: input, shape index: {}]
  %s3 = inlined_call_operand.vmem [shape: f32[1,32], index: 3, kind: input, shape index: {}]
  %s4 = inlined_call_operand.vmem [shape: f32[32,64], index: 4, kind: input, shape index: {}]
  %s5 = inlined_call_operand.vmem [shape: f32[1,64], index: 5, kind: input, shape index: {}]
  %s6 = inlined_call_operand.vmem [shape: f32[32,16], index: 6, kind: input, shape index: {}]
  %s7 = inlined_call_operand.vmem [shape: f32[1,16], index: 7, kind: input, shape index: {}]
  %s8 = inlined_call_operand.hbm [shape: f32[16,16], index: 8, kind: output, shape index: {0}]
  %s9 = inlined_call_operand.hbm [shape: f32[16,64], index: 9, kind: output, shape index: {1}]
  %10 = xla_tuple %s8, %s9
  %s11 = sld [smem:[#allocation0]]
  $region58: #{tpu_custom_call.1} parent=0
    _
  %s13 = ssub.s32 1, %s11
  %s14 = scalar_select 0, %s13, %s11
  $region1: #{tpu_custom_call.1} parent=0
    #allocation2 [shape = 'u8[8192]{0}', space=vmem, size = 0x2000, scoped, tag = 'input window, operand 1, single buffered']
    #allocation3 [shape = 's32[1]{0}', space=sflag, size = 0x4, scoped, tag = 'scoped memory for tpu_custom_call.1']
    #allocation4 [shape = 's32[1]{0}', space=sflag, size = 0x4, scoped, tag = 'scoped memory for tpu_custom_call.1']
    #allocation5 [shape = 'u8[8192]{0}', space=vmem, size = 0x2000, scoped, tag = 'input window, operand 2, single buffered']
    #allocation6 [shape = 's32[1]{0}', space=sflag, size = 0x4, scoped, tag = 'scoped memory for tpu_custom_call.1']
    #allocation7 [shape = 'u8[8192]{0}', space=vmem, size = 0x2000, scoped, tag = 'output window, operand 0, single buffered']
    #allocation8 [shape = 'u8[8192]{0}', space=vmem, size = 0x2000, scoped, tag = 'output window, operand 1, single buffered']
    #allocation9 [shape = 's32[1]{0}', space=sflag, size = 0x4, scoped, tag = 'scoped memory for tpu_custom_call.1']
    %15 = vsyncpa [#allocation3], 0
    %16 = vsyncpa [#allocation6], 0
    %17 = vsyncpa [#allocation4], 0
    %18 = vsyncpa [#allocation9], 0
    // Predicated region
    $region2: #{tpu_custom_call.1} parent=1 // pred_check
      _
    $region3: #{tpu_custom_call.1} parent=1 // pred_check_branch
      %20 = sbr.rel (0) target = $region5
    $region4: #{tpu_custom_call.1} parent=1 // pred_region
      _
    $region5: #{tpu_custom_call.1} parent=1 // pred_fallthru
      _
    // Predicated region
    $region6: #{tpu_custom_call.1} parent=1 // pred_check
      _
    $region7: #{tpu_custom_call.1} parent=1 // pred_check_branch
      %22 = sbr.rel (0) target = $region9
    $region8: #{tpu_custom_call.1} parent=1 // pred_region
      %s24 = ssub.s32 256, 256
      %25 = vsyncadd [#allocation3], %s24
      %s26 = sshll.u32 [#allocation2], 4
      %s27 = int_to_ptr.vmem [resolvable:$true] %s26
      %32 = dma.hbm_to_vmem [thread:$0]  %s1, 256, %s27, [#allocation3], 128, 128, 8
    $region9: #{tpu_custom_call.1} parent=1 // pred_fallthru
      _
    // Predicated region
    $region10: #{tpu_custom_call.1} parent=1 // pred_check
      _
    $region11: #{tpu_custom_call.1} parent=1 // pred_check_branch
      %34 = sbr.rel (0) target = $region13
    $region12: #{tpu_custom_call.1} parent=1 // pred_region
      %s36 = ssub.s32 256, 256
      %37 = vsyncadd [#allocation6], %s36
      %s38 = sshll.u32 [#allocation5], 4
      %s39 = int_to_ptr.vmem [resolvable:$true] %s38
      %44 = dma.hbm_to_vmem [thread:$0]  %s2, 256, %s39, [#allocation6], 128, 128, 8
    $region13: #{tpu_custom_call.1} parent=1 // pred_fallthru
      _
    // Predicated region
    $region14: #{tpu_custom_call.1} parent=1 // pred_check
      _
    $region15: #{tpu_custom_call.1} parent=1 // pred_check_branch
      %46 = sbr.rel (0) target = $region17
    $region16: #{tpu_custom_call.1} parent=1 // pred_region
      _
    $region17: #{tpu_custom_call.1} parent=1 // pred_fallthru
      _
    // Predicated region
    $region18: #{tpu_custom_call.1} parent=1 // pred_check
      _
    $region19: #{tpu_custom_call.1} parent=1 // pred_check_branch
      %48 = sbr.rel (0) target = $region21
    $region20: #{tpu_custom_call.1} parent=1 // pred_region
      _
    $region21: #{tpu_custom_call.1} parent=1 // pred_fallthru
      _
    // Predicated region
    $region22: #{tpu_custom_call.1} parent=1 // pred_check
      _
    $region23: #{tpu_custom_call.1} parent=1 // pred_check_branch
      %50 = sbr.rel (0) target = $region25
    $region24: #{tpu_custom_call.1} parent=1 // pred_region
      _
    $region25: #{tpu_custom_call.1} parent=1 // pred_fallthru
      _
    // Predicated region
    $region26: #{tpu_custom_call.1} parent=1 // pred_check
      _
    $region27: #{tpu_custom_call.1} parent=1 // pred_check_branch
      %52 = sbr.rel (0) target = $region29
    $region28: #{tpu_custom_call.1} parent=1 // pred_region
      _
    $region29: #{tpu_custom_call.1} parent=1 // pred_fallthru
      _
    // Predicated region
    $region30: #{tpu_custom_call.1} parent=1 // pred_check
      _
    $region31: #{tpu_custom_call.1} parent=1 // pred_check_branch
      %54 = sbr.rel (0) target = $region33
    $region32: #{tpu_custom_call.1} parent=1 // pred_region
      _
    $region33: #{tpu_custom_call.1} parent=1 // pred_fallthru
      _
    // Predicated region
    $region34: #{tpu_custom_call.1} parent=1 // pred_check
      _
    $region35: #{tpu_custom_call.1} parent=1 // pred_check_branch
      %56 = sbr.rel (0) target = $region37
    $region36: #{tpu_custom_call.1} parent=1 // pred_region
      %57 = dma.done [#allocation3], 256
    $region37: #{tpu_custom_call.1} parent=1 // pred_fallthru
      _
    // Predicated region
    $region38: #{tpu_custom_call.1} parent=1 // pred_check
      _
    $region39: #{tpu_custom_call.1} parent=1 // pred_check_branch
      %59 = sbr.rel (0) target = $region41
    $region40: #{tpu_custom_call.1} parent=1 // pred_region
      %60 = dma.done [#allocation6], 256
    $region41: #{tpu_custom_call.1} parent=1 // pred_fallthru
      _
    %v61 = vld [vmem:[%s3] sm:$0x1]
    %v62 = vld [vmem:[%s5] sm:$0x1]
    %v63 = vld [vmem:[%s7] sm:$0x1]
    %v64 = vld [vmem:[%s0] sm:$0xff]
    %v65 = vld [vmem:[%s0 + $0x8] sm:$0xff]
    %v66 = vld [vmem:[#allocation5] sm:$0xff]
    %v67 = vld [vmem:[#allocation5 + $0x8] sm:$0xff]
    %v69 = vlaneseq
    %v70 = vshrl.u32 %v69, 7
    %v71 = vsub.s32 0, %v70
    %v72 = vrot.slane %v61, %v71
    %vm74 = vcmask 130048
    %v76 = vsel %vm74, %v64, 0
    %v79 = vsel %vm74, %v65, 0
    %81 = vmatprep.subr.mxu0 0.0
    %82 = vmatpush1.msra.mxu0 0.0
    %83 = vmatprep.subr.mxu0 0.0
    %84 = vmatpush1.msra.mxu0 0.0
    %85 = vmatprep.subr.mxu0 0.0
    %86 = vmatpush1.msra.mxu0 0.0
    %87 = vmatprep.subr.mxu0 0.0
    %88 = vmatpush1.msra.mxu0 0.0
    %89 = vmatprep.subr.mxu0 0.0
    %90 = vmatpush1.msra.mxu0 0.0
    %91 = vmatprep.subr.mxu0 0.0
    %92 = vmatpush1.msra.mxu0 0.0
    %93 = vmatprep.subr.mxu0 0.0
    %94 = vmatpush1.msra.mxu0 0.0
    %95 = vmatprep.subr.mxu0 0.0
    %96 = vmatpush1.msra.mxu0 0.0
    %97 = vmatprep.subr.mxu0 0.0
    %98 = vmatpush1.msra.mxu0 0.0
    %99 = vmatprep.subr.mxu0 0.0
    %100 = vmatpush1.msra.mxu0 0.0
    %101 = vmatprep.subr.mxu0 0.0
    %102 = vmatpush1.msra.mxu0 0.0
    %103 = vmatprep.subr.mxu0 0.0
    %104 = vmatpush1.msra.mxu0 0.0
    %105 = vmatprep.subr.mxu0 0.0
    %106 = vmatpush1.msra.mxu0 0.0
    %107 = vmatprep.subr.mxu0 0.0
    %108 = vmatpush1.msra.mxu0 0.0
    %109 = vmatprep.subr.mxu0 0.0
    %110 = vmatpush1.msra.mxu0 %v67
    %111 = vmatprep.subr.mxu0 0.0
    %112 = vmatpush1.msra.mxu0 %v66
    %113 = vmatprep.subr.mxu0 0.0
    %114 = vmatpush2.msra.mxu0 0.0
    %115 = vmatprep.subr.mxu0 0.0
    %116 = vmatpush2.msra.mxu0 0.0
    %117 = vmatprep.subr.mxu0 0.0
    %118 = vmatpush2.msra.mxu0 0.0
    %119 = vmatprep.subr.mxu0 0.0
    %120 = vmatpush2.msra.mxu0 0.0
    %121 = vmatprep.subr.mxu0 0.0
    %122 = vmatpush2.msra.mxu0 0.0
    %123 = vmatprep.subr.mxu0 0.0
    %124 = vmatpush2.msra.mxu0 0.0
    %125 = vmatprep.subr.mxu0 0.0
    %126 = vmatpush2.msra.mxu0 0.0
    %127 = vmatprep.subr.mxu0 0.0
    %128 = vmatpush2.msra.mxu0 0.0
    %129 = vmatprep.subr.mxu0 0.0
    %130 = vmatpush2.msra.mxu0 0.0
    %131 = vmatprep.subr.mxu0 0.0
    %132 = vmatpush2.msra.mxu0 0.0
    %133 = vmatprep.subr.mxu0 0.0
    %134 = vmatpush2.msra.mxu0 0.0
    %135 = vmatprep.subr.mxu0 0.0
    %136 = vmatpush2.msra.mxu0 0.0
    %137 = vmatprep.subr.mxu0 0.0
    %138 = vmatpush2.msra.mxu0 0.0
    %139 = vmatprep.subr.mxu0 0.0
    %140 = vmatpush2.msra.mxu0 0.0
    %141 = vmatprep.subr.mxu0 0.0
    %142 = vmatpush2.msra.mxu0 0.0
    %143 = vmatprep.subr.mxu0 0.0
    %144 = vmatpush2.msra.mxu0 0.0
    %145 = vmatprep.mubr.f32.mxu0 0.0
    %146 = vmatmul.mubr.f32.gmra.mxu0 %v76
    %v147 = vpop.f32.mrf.mxu0
    %v148 = vadd.f32 %v72, %v147
    %v149 = vpop.f32.mrf.mxu0
    %150 = vmatprep.mubr.f32.mxu0 0.0
    %151 = vmatmul.mubr.f32.gmra.mxu0 %v79
    %v152 = vpop.f32.mrf.mxu0
    %v153 = vadd.f32 %v72, %v152
    %v154 = vpop.f32.mrf.mxu0
    %155 = vdwg.mxu0
    %v156 = vmax.f32 %v148, 0.0
    %v157 = vmax.f32 %v153, 0.0
    %v158 = vld [vmem:[%s4] sm:$0xff]
    %v159 = vld [vmem:[%s4 + $0x8] sm:$0xff]
    %v160 = vld [vmem:[%s4 + $0x10] sm:$0xff]
    %v161 = vld [vmem:[%s4 + $0x18] sm:$0xff]
    %v163 = vlaneseq
    %v164 = vshrl.u32 %v163, 7
    %v165 = vsub.s32 0, %v164
    %v166 = vrot.slane %v62, %v165
    %vm168 = vcmask 261120
    %v170 = vsel %vm168, %v156, 0
    %v173 = vsel %vm168, %v157, 0
    %175 = vmatprep.subr.mxu0 0.0
    %176 = vmatpush1.msra.mxu0 0.0
    %177 = vmatprep.subr.mxu0 0.0
    %178 = vmatpush1.msra.mxu0 0.0
    %179 = vmatprep.subr.mxu0 0.0
    %180 = vmatpush1.msra.mxu0 0.0
    %181 = vmatprep.subr.mxu0 0.0
    %182 = vmatpush1.msra.mxu0 0.0
    %183 = vmatprep.subr.mxu0 0.0
    %184 = vmatpush1.msra.mxu0 0.0
    %185 = vmatprep.subr.mxu0 0.0
    %186 = vmatpush1.msra.mxu0 0.0
    %187 = vmatprep.subr.mxu0 0.0
    %188 = vmatpush1.msra.mxu0 0.0
    %189 = vmatprep.subr.mxu0 0.0
    %190 = vmatpush1.msra.mxu0 0.0
    %191 = vmatprep.subr.mxu0 0.0
    %192 = vmatpush1.msra.mxu0 0.0
    %193 = vmatprep.subr.mxu0 0.0
    %194 = vmatpush1.msra.mxu0 0.0
    %195 = vmatprep.subr.mxu0 0.0
    %196 = vmatpush1.msra.mxu0 0.0
    %197 = vmatprep.subr.mxu0 0.0
    %198 = vmatpush1.msra.mxu0 0.0
    %199 = vmatprep.subr.mxu0 0.0
    %200 = vmatpush1.msra.mxu0 %v161
    %201 = vmatprep.subr.mxu0 0.0
    %202 = vmatpush1.msra.mxu0 %v160
    %203 = vmatprep.subr.mxu0 0.0
    %204 = vmatpush1.msra.mxu0 %v159
    %205 = vmatprep.subr.mxu0 0.0
    %206 = vmatpush1.msra.mxu0 %v158
    %207 = vmatprep.subr.mxu0 0.0
    %208 = vmatpush2.msra.mxu0 0.0
    %209 = vmatprep.subr.mxu0 0.0
    %210 = vmatpush2.msra.mxu0 0.0
    %211 = vmatprep.subr.mxu0 0.0
    %212 = vmatpush2.msra.mxu0 0.0
    %213 = vmatprep.subr.mxu0 0.0
    %214 = vmatpush2.msra.mxu0 0.0
    %215 = vmatprep.subr.mxu0 0.0
    %216 = vmatpush2.msra.mxu0 0.0
    %217 = vmatprep.subr.mxu0 0.0
    %218 = vmatpush2.msra.mxu0 0.0
    %219 = vmatprep.subr.mxu0 0.0
    %220 = vmatpush2.msra.mxu0 0.0
    %221 = vmatprep.subr.mxu0 0.0
    %222 = vmatpush2.msra.mxu0 0.0
    %223 = vmatprep.subr.mxu0 0.0
    %224 = vmatpush2.msra.mxu0 0.0
    %225 = vmatprep.subr.mxu0 0.0
    %226 = vmatpush2.msra.mxu0 0.0
    %227 = vmatprep.subr.mxu0 0.0
    %228 = vmatpush2.msra.mxu0 0.0
    %229 = vmatprep.subr.mxu0 0.0
    %230 = vmatpush2.msra.mxu0 0.0
    %231 = vmatprep.subr.mxu0 0.0
    %232 = vmatpush2.msra.mxu0 0.0
    %233 = vmatprep.subr.mxu0 0.0
    %234 = vmatpush2.msra.mxu0 0.0
    %235 = vmatprep.subr.mxu0 0.0
    %236 = vmatpush2.msra.mxu0 0.0
    %237 = vmatprep.subr.mxu0 0.0
    %238 = vmatpush2.msra.mxu0 0.0
    %239 = vmatprep.mubr.f32.mxu0 0.0
    %240 = vmatmul.mubr.f32.gmra.mxu0 %v170
    %v241 = vpop.f32.mrf.mxu0
    %v242 = vadd.f32 %v166, %v241
    %v243 = vpop.f32.mrf.mxu0
    %244 = vmatprep.mubr.f32.mxu0 0.0
    %245 = vmatmul.mubr.f32.gmra.mxu0 %v173
    %v246 = vpop.f32.mrf.mxu0
    %v247 = vadd.f32 %v166, %v246
    %v248 = vpop.f32.mrf.mxu0
    %249 = vdwg.mxu0
    %v250 = vmul.f32 %v242, 0.5
    %v251 = vmul.f32 %v247, 0.5
    %v252 = vmul.f32 %v250, 1.442695
    %v253 = vpow.pop %v252
    %v254 = vmul.f32 %v251, 1.442695
    %v255 = vpow.pop %v254
    %v256 = vld [vmem:[#allocation2] sm:$0xff]
    %v257 = vld [vmem:[#allocation2 + $0x8] sm:$0xff]
    %260 = vrot.lane.b32.xlu0 %v256, 32
    %v261 = vpop.permute.xlu0 %260
    %262 = vrot.lane.b32.xlu0 %v257, 32
    %v263 = vpop.permute.xlu0 %262
    %v266 = vmul.f32 %v253, %v261
    %v267 = vmul.f32 %v255, %v263
    %270 = vrot.lane.b32.xlu0 %v266, 96
    %v271 = vpop.permute.xlu0 %270
    %272 = vrot.lane.b32.xlu0 %v267, 96
    %v273 = vpop.permute.xlu0 %272
    %v276 = vadd.f32 %v242, %v271
    %v277 = vadd.f32 %v247, %v273
    %v278 = vld [vmem:[%s6] sm:$0xff]
    %v279 = vld [vmem:[%s6 + $0x8] sm:$0xff]
    %v280 = vld [vmem:[%s6 + $0x10] sm:$0xff]
    %v281 = vld [vmem:[%s6 + $0x18] sm:$0xff]
    %v283 = vlaneseq
    %v284 = vshrl.u32 %v283, 7
    %v285 = vsub.s32 0, %v284
    %v286 = vrot.slane %v63, %v285
    %v289 = vsel %vm168, %v276, 0
    %v292 = vsel %vm168, %v277, 0
    %294 = vmatprep.subr.mxu0 0.0
    %295 = vmatpush1.msra.mxu0 0.0
    %296 = vmatprep.subr.mxu0 0.0
    %297 = vmatpush1.msra.mxu0 0.0
    %298 = vmatprep.subr.mxu0 0.0
    %299 = vmatpush1.msra.mxu0 0.0
    %300 = vmatprep.subr.mxu0 0.0
    %301 = vmatpush1.msra.mxu0 0.0
    %302 = vmatprep.subr.mxu0 0.0
    %303 = vmatpush1.msra.mxu0 0.0
    %304 = vmatprep.subr.mxu0 0.0
    %305 = vmatpush1.msra.mxu0 0.0
    %306 = vmatprep.subr.mxu0 0.0
    %307 = vmatpush1.msra.mxu0 0.0
    %308 = vmatprep.subr.mxu0 0.0
    %309 = vmatpush1.msra.mxu0 0.0
    %310 = vmatprep.subr.mxu0 0.0
    %311 = vmatpush1.msra.mxu0 0.0
    %312 = vmatprep.subr.mxu0 0.0
    %313 = vmatpush1.msra.mxu0 0.0
    %314 = vmatprep.subr.mxu0 0.0
    %315 = vmatpush1.msra.mxu0 0.0
    %316 = vmatprep.subr.mxu0 0.0
    %317 = vmatpush1.msra.mxu0 0.0
    %318 = vmatprep.subr.mxu0 0.0
    %319 = vmatpush1.msra.mxu0 %v281
    %320 = vmatprep.subr.mxu0 0.0
    %321 = vmatpush1.msra.mxu0 %v280
    %322 = vmatprep.subr.mxu0 0.0
    %323 = vmatpush1.msra.mxu0 %v279
    %324 = vmatprep.subr.mxu0 0.0
    %325 = vmatpush1.msra.mxu0 %v278
    %326 = vmatprep.subr.mxu0 0.0
    %327 = vmatpush2.msra.mxu0 0.0
    %328 = vmatprep.subr.mxu0 0.0
    %329 = vmatpush2.msra.mxu0 0.0
    %330 = vmatprep.subr.mxu0 0.0
    %331 = vmatpush2.msra.mxu0 0.0
    %332 = vmatprep.subr.mxu0 0.0
    %333 = vmatpush2.msra.mxu0 0.0
    %334 = vmatprep.subr.mxu0 0.0
    %335 = vmatpush2.msra.mxu0 0.0
    %336 = vmatprep.subr.mxu0 0.0
    %337 = vmatpush2.msra.mxu0 0.0
    %338 = vmatprep.subr.mxu0 0.0
    %339 = vmatpush2.msra.mxu0 0.0
    %340 = vmatprep.subr.mxu0 0.0
    %341 = vmatpush2.msra.mxu0 0.0
    %342 = vmatprep.subr.mxu0 0.0
    %343 = vmatpush2.msra.mxu0 0.0
    %344 = vmatprep.subr.mxu0 0.0
    %345 = vmatpush2.msra.mxu0 0.0
    %346 = vmatprep.subr.mxu0 0.0
    %347 = vmatpush2.msra.mxu0 0.0
    %348 = vmatprep.subr.mxu0 0.0
    %349 = vmatpush2.msra.mxu0 0.0
    %350 = vmatprep.subr.mxu0 0.0
    %351 = vmatpush2.msra.mxu0 0.0
    %352 = vmatprep.subr.mxu0 0.0
    %353 = vmatpush2.msra.mxu0 0.0
    %354 = vmatprep.subr.mxu0 0.0
    %355 = vmatpush2.msra.mxu0 0.0
    %356 = vmatprep.subr.mxu0 0.0
    %357 = vmatpush2.msra.mxu0 0.0
    %358 = vmatprep.mubr.f32.mxu0 0.0
    %359 = vmatmul.mubr.f32.gmra.mxu0 %v289
    %v360 = vpop.f32.mrf.mxu0
    %v361 = vadd.f32 %v286, %v360
    %v362 = vpop.f32.mrf.mxu0
    %363 = vmatprep.mubr.f32.mxu0 0.0
    %364 = vmatmul.mubr.f32.gmra.mxu0 %v292
    %v365 = vpop.f32.mrf.mxu0
    %v366 = vadd.f32 %v286, %v365
    %v367 = vpop.f32.mrf.mxu0
    %368 = vdwg.mxu0
    %v369 = vmax.f32 %v361, 0.0
    %v370 = vmax.f32 %v366, 0.0
    %371 = vst.msk [vmem:[#allocation7] sm:$0xff] %vm74, %v369
    %372 = vst.msk [vmem:[#allocation7 + $0x8] sm:$0xff] %vm74, %v370
    %vm373 = vcmask 523264
    %374 = vst.msk [vmem:[#allocation8] sm:$0xff] %vm373, %v242
    %375 = vst.msk [vmem:[#allocation8 + $0x8] sm:$0xff] %vm373, %v247
    // Predicated region
    $region42: #{tpu_custom_call.1} parent=1 // pred_check
      _
    $region43: #{tpu_custom_call.1} parent=1 // pred_check_branch
      %377 = sbr.rel (0) target = $region45
    $region44: #{tpu_custom_call.1} parent=1 // pred_region
      %s379 = ssub.s32 256, 256
      %380 = vsyncadd [#allocation4], %s379
      %s381 = sshll.u32 [#allocation7], 4
      %s382 = int_to_ptr.vmem [resolvable:$true] %s381
      %387 = dma.vmem_to_hbm [thread:$0]  %s382, 256, %s8, [#allocation4], 128, 128, 8
    $region45: #{tpu_custom_call.1} parent=1 // pred_fallthru
      _
    // Predicated region
    $region46: #{tpu_custom_call.1} parent=1 // pred_check
      _
    $region47: #{tpu_custom_call.1} parent=1 // pred_check_branch
      %389 = sbr.rel (0) target = $region49
    $region48: #{tpu_custom_call.1} parent=1 // pred_region
      %s391 = ssub.s32 256, 256
      %392 = vsyncadd [#allocation9], %s391
      %s393 = sshll.u32 [#allocation8], 4
      %s394 = int_to_ptr.vmem [resolvable:$true] %s393
      %399 = dma.vmem_to_hbm [thread:$0]  %s394, 256, %s9, [#allocation9], 128, 128, 8
    $region49: #{tpu_custom_call.1} parent=1 // pred_fallthru
      _
    // Predicated region
    $region50: #{tpu_custom_call.1} parent=1 // pred_check
      _
    $region51: #{tpu_custom_call.1} parent=1 // pred_check_branch
      %401 = sbr.rel (0) target = $region53
    $region52: #{tpu_custom_call.1} parent=1 // pred_region
      %402 = dma.done [#allocation4], 256
    $region53: #{tpu_custom_call.1} parent=1 // pred_fallthru
      _
    // Predicated region
    $region54: #{tpu_custom_call.1} parent=1 // pred_check
      _
    $region55: #{tpu_custom_call.1} parent=1 // pred_check_branch
      %404 = sbr.rel (0) target = $region57
    $region56: #{tpu_custom_call.1} parent=1 // pred_region
      %405 = dma.done [#allocation9], 256
    $region57: #{tpu_custom_call.1} parent=1 // pred_fallthru
      _
    %406 = vsyncpa [#allocation3], 1
    %407 = vsyncpa [#allocation6], 1
    %408 = vsyncpa [#allocation4], 1
    %409 = vsyncpa [#allocation9], 1

</llo_original>
